<compile_context>
chip_gen: v5e
topology: v5e:2x2
jax: 0.10.0
libtpu: 0.0.40
codegen_flags: <defaults>
</compile_context>

<pallas_src>
import functools

import jax
import jax.numpy as jnp
from jax import lax
from jax.experimental import pallas as pl
from jax.experimental.pallas import tpu as pltpu

LANE = 128
_NEG_BIG = -1e30


def _round_up(x, m):
    return (x + m - 1) // m * m


def _cdiv(a, b):
    return -(-a // b)


def _sublane(dtype):
    # dtype-aware minimum sublane multiple (f32: 8, bf16: 16, int8/fp8: 32).
    return {4: 8, 2: 16, 1: 32}[jnp.dtype(dtype).itemsize]


def _pad2(a, rows, cols):
    r, c = a.shape
    if r == rows and c == cols:
        return a
    return jnp.pad(a, ((0, rows - r), (0, cols - c)))


def _vmem_budget():
    """Generation-aware scoped-VMEM budget (leaves headroom for Mosaic scratch)."""
    try:
        cap = int(pltpu.get_tpu_info().vmem_capacity_bytes)
        if cap <= 0:
            cap = 64 * 1024 * 1024
    except Exception:
        cap = 64 * 1024 * 1024          # conservative (v7x per-TC) fallback
    return cap * 3 // 4                  # ~48 MiB on v7x, ~96 MiB on v5e/v6e


_PIPELINE_MODE_OK = None


def _pipeline_mode_supported():
    """Probe once whether BlockSpec(pipeline_mode=pl.Buffered(1)) lowers on this
    jax/libtpu; otherwise fall back to default double-buffering."""
    global _PIPELINE_MODE_OK
    if _PIPELINE_MODE_OK is None:
        try:
            def _copy(x_ref, o_ref):
                o_ref[...] = x_ref[...]
            spec = pl.BlockSpec((8, 128), lambda i: (0, 0),
                                pipeline_mode=pl.Buffered(1))
            x = jnp.zeros((8, 128), jnp.float32)
            jax.block_until_ready(pl.pallas_call(
                _copy,
                out_shape=jax.ShapeDtypeStruct((8, 128), jnp.float32),
                grid=(1,),
                in_specs=[spec],
                out_specs=pl.BlockSpec((8, 128), lambda i: (0, 0)))(x))
            _PIPELINE_MODE_OK = True
        except Exception:
            _PIPELINE_MODE_OK = False
    return _PIPELINE_MODE_OK


def _const_spec(block_shape, index_map):
    """Spec for an operand whose block never changes across the grid:
    single-buffer it (double-buffering a constant block is pure VMEM waste)."""
    if _pipeline_mode_supported():
        return pl.BlockSpec(block_shape, index_map, pipeline_mode=pl.Buffered(1))
    return pl.BlockSpec(block_shape, index_map)


# ---------------------------------------------------------------------------
# Kernel: fully fused path (single row tile; x2/K/V/weights VMEM-resident).
# ---------------------------------------------------------------------------
def _fused_kernel(x1_ref, x2_ref, wq_ref, bq_ref, wk_ref, bk_ref, wv_ref,
                  bv_ref, kb_ref, wo_ref, bo_ref, o_ref, *, use_key_bias):
    cdt = x1_ref.dtype
    # Projections (the 1/sqrt(8) score scale is pre-folded into wq/bq).
    q = (jnp.dot(x1_ref[...], wq_ref[...], preferred_element_type=jnp.float32)
         + bq_ref[...]).astype(cdt)
    x2 = x2_ref[...]
    k = (jnp.dot(x2, wk_ref[...], preferred_element_type=jnp.float32)
         + bk_ref[...]).astype(cdt)
    v = (jnp.dot(x2, wv_ref[...], preferred_element_type=jnp.float32)
         + bv_ref[...]).astype(cdt)

    # Scores: 'md,nd->mn' (K consumed in natural layout, no k.T materialized).
    s = lax.dot_general(q, k, (((1,), (1,)), ((), ())),
                        preferred_element_type=jnp.float32)
    if use_key_bias:
        s = s + kb_ref[...]              # 0 on valid keys, -1e30 on padded keys

    m = jnp.max(s, axis=-1, keepdims=True)
    p = jnp.exp(s - m)
    l = jnp.sum(p, axis=-1, keepdims=True)
    inv = pl.reciprocal(l, approx=True)
    inv = inv * (2.0 - l * inv)          # one Newton step -> f32-accurate
    ctx = jnp.dot(p.astype(cdt), v, preferred_element_type=jnp.float32) * inv
    out = (jnp.dot(ctx.astype(cdt), wo_ref[...],
                   preferred_element_type=jnp.float32) + bo_ref[...])
    o_ref[...] = out.astype(o_ref.dtype)


# ---------------------------------------------------------------------------
# Kernel: Q projection (scale folded into wq/bq); kept out of the attention
# kernel so wq/bq never occupy VMEM during the kv loop.
# ---------------------------------------------------------------------------
def _q_proj_kernel(x1_ref, wq_ref, bq_ref, q_ref):
    q = (jnp.dot(x1_ref[...], wq_ref[...], preferred_element_type=jnp.float32)
         + bq_ref[...])
    q_ref[...] = q.astype(q_ref.dtype)


# ---------------------------------------------------------------------------
# Kernel: K/V projection, tiled over N2 (materialized once, not per q tile).
# ---------------------------------------------------------------------------
def _kv_proj_kernel(x2_ref, wk_ref, bk_ref, wv_ref, bv_ref, k_ref, v_ref):
    x2 = x2_ref[...]
    k = jnp.dot(x2, wk_ref[...], preferred_element_type=jnp.float32) + bk_ref[...]
    v = jnp.dot(x2, wv_ref[...], preferred_element_type=jnp.float32) + bv_ref[...]
    k_ref[...] = k.astype(k_ref.dtype)
    v_ref[...] = v.astype(v_ref.dtype)


# ---------------------------------------------------------------------------
# Kernel: flash-style cross attention + output projection.
#   grid = (B tiles [parallel], N2 tiles [arbitrary / reduction])
# When nkv == 1 the K/V blocks are constant-indexed, so they are DMA'd once and
# stay VMEM-resident across all row tiles (no per-row-tile K/V re-stream).
# ---------------------------------------------------------------------------
def _flash_attn_kernel(q_ref, k_ref, v_ref, kb_ref, wo_ref, bo_ref, o_ref,
                       m_sc, l_sc, acc_sc, *, use_key_bias):
    kv = pl.program_id(1)
    nkv = pl.num_programs(1)

    @pl.when(kv == 0)
    def _init():
        m_sc[...] = jnp.full(m_sc.shape, -jnp.inf, jnp.float32)
        l_sc[...] = jnp.zeros(l_sc.shape, jnp.float32)
        acc_sc[...] = jnp.zeros(acc_sc.shape, jnp.float32)

    # Scores for this kv tile: 'md,nd->mn' (no k.T copy).
    s = lax.dot_general(q_ref[...], k_ref[...], (((1,), (1,)), ((), ())),
                        preferred_element_type=jnp.float32)
    if use_key_bias:
        s = s + kb_ref[...]              # single VPU add: 0 valid, -1e30 padded

    # Online (flash) softmax update — all f32 on the VPU/EUP.
    m_prev = m_sc[...]
    m_new = jnp.maximum(m_prev, jnp.max(s, axis=-1, keepdims=True))
    alpha = jnp.exp(m_prev - m_new)
    p = jnp.exp(s - m_new)
    l_sc[...] = alpha * l_sc[...] + jnp.sum(p, axis=-1, keepdims=True)
    acc_sc[...] = alpha * acc_sc[...] + jnp.dot(
        p.astype(v_ref.dtype), v_ref[...], preferred_element_type=jnp.float32)
    m_sc[...] = m_new

    @pl.when(kv == nkv - 1)
    def _finalize():
        l = l_sc[...]
        inv = pl.reciprocal(l, approx=True)
        inv = inv * (2.0 - l * inv)      # one Newton step -> f32-accurate
        ctx = acc_sc[...] * inv
        out = (jnp.dot(ctx.astype(wo_ref.dtype), wo_ref[...],
                       preferred_element_type=jnp.float32) + bo_ref[...])
        o_ref[...] = out.astype(o_ref.dtype)


# ---------------------------------------------------------------------------
# Wrapper
# ---------------------------------------------------------------------------
def mutilhead_cross_attention(x1, x2, params, *, tm=256, tn=512,
                              compute_dtype=None, max_resident_kv=2048):
    """x1: (B, in_dim1), x2: (N2, in_dim2). Returns (B, in_dim1).

    compute_dtype: dtype of the MXU operands (q/k/v/weights). Pass jnp.bfloat16
    on v6e/v7x for ~4x MXU rate and half the K/V bytes; softmax / accumulation
    math is always f32.
    """
    B, in_dim1 = x1.shape
    N2, in_dim2 = x2.shape
    wq, bq, wk, bk, wv, bv, wo, bo = params
    dqk, dv = wq.shape[1], wv.shape[1]
    out_dtype = x1.dtype
    cdtype = jnp.dtype(compute_dtype) if compute_dtype is not None else jnp.dtype(x1.dtype)
    isz = cdtype.itemsize
    sub = _sublane(cdtype)
    budget = _vmem_budget()

    # Fold the reference's score scale into Wq/bq.  This is intentionally
    # 1/sqrt(8) (torch code uses `/ 8 ** 0.5`), NOT 1/sqrt(k_dim) — do not "fix".
    scale = 1.0 / (8.0 ** 0.5)
    wq = wq.astype(jnp.float32) * scale
    bq = bq.astype(jnp.float32) * scale

    # Cast MXU operands to the compute dtype.
    x1c, x2c = x1.astype(cdtype), x2.astype(cdtype)
    wq, bq = wq.astype(cdtype), bq.astype(cdtype)
    wk, bk = wk.astype(cdtype), bk.astype(cdtype)
    wv, bv = wv.astype(cdtype), bv.astype(cdtype)
    wo, bo = wo.astype(cdtype), bo.astype(cdtype)

    # Lane-dense feature padding (multiples of 128); dtype-aware row padding.
    d1p = _round_up(in_dim1, LANE)
    d2p = _round_up(in_dim2, LANE)
    dqkp = _round_up(dqk, LANE)
    dvp = _round_up(dv, LANE)
    Bp0 = _round_up(B, sub)
    N2p0 = _round_up(N2, sub)

    # Row tile TM: prefer >= 2 row tiles so the 'parallel' axis can shard across
    # TensorCores (v7x has 2 TCs/chip); never below the sublane multiple.
    TM = min(_round_up(tm, sub), Bp0)
    nb = _cdiv(Bp0, TM)
    if nb < 2 and Bp0 > sub:
        nb = 2
    TM = _round_up(_cdiv(Bp0, nb), sub)
    Bp = TM * nb

    # Zero-padded weights / inputs (padded features contribute nothing).
    wqp, bqp = _pad2(wq, d1p, dqkp), _pad2(bq, 1, dqkp)
    wkp, bkp = _pad2(wk, d2p, dqkp), _pad2(bk, 1, dqkp)
    wvp, bvp = _pad2(wv, d2p, dvp), _pad2(bv, 1, dvp)
    wop, bop = _pad2(wo, dvp, d1p), _pad2(bo, 1, d1p)
    x1p = _pad2(x1c, Bp, d1p)

    compiler_1d = pltpu.CompilerParams(dimension_semantics=("parallel",),
                                       vmem_limit_bytes=budget)

    # ------------------------------------------------------------------
    # Path 1: fully fused (nb == 1 and everything fits in VMEM).
    # Removes the K/V HBM round trip — the common small-B case for this neck.
    # ------------------------------------------------------------------
    fused_bytes = (isz * (TM * d1p + N2p0 * d2p + d1p * dqkp + d2p * dqkp
                          + d2p * dvp + dvp * d1p + TM * d1p)
                   + 4 * (TM * dqkp + N2p0 * (dqkp + dvp) + 2 * TM * N2p0
                          + TM * dvp))
    if nb == 1 and 2 * fused_bytes < budget:
        N2p = N2p0
        x2p = _pad2(x2c, N2p, d2p)
        key_bias = jnp.where(jnp.arange(N2p)[None, :] < N2, 0.0,
                             _NEG_BIG).astype(jnp.float32)
        kern = functools.partial(_fused_kernel, use_key_bias=(N2p != N2))
        out = pl.pallas_call(
            kern,
            out_shape=jax.ShapeDtypeStruct((Bp, d1p), out_dtype),
            grid=(nb,),
            in_specs=[
                pl.BlockSpec((TM, d1p), lambda i: (i, 0)),       # x1
                _const_spec((N2p, d2p), lambda i: (0, 0)),       # x2 (resident)
                _const_spec((d1p, dqkp), lambda i: (0, 0)),      # wq (scaled)
                _const_spec((1, dqkp), lambda i: (0, 0)),        # bq (scaled)
                _const_spec((d2p, dqkp), lambda i: (0, 0)),      # wk
                _const_spec((1, dqkp), lambda i: (0, 0)),        # bk
                _const_spec((d2p, dvp), lambda i: (0, 0)),       # wv
                _const_spec((1, dvp), lambda i: (0, 0)),         # bv
                _const_spec((1, N2p), lambda i: (0, 0)),         # key bias row
                _const_spec((dvp, d1p), lambda i: (0, 0)),       # wo
                _const_spec((1, d1p), lambda i: (0, 0)),         # bo
            ],
            out_specs=pl.BlockSpec((TM, d1p), lambda i: (i, 0)),
            compiler_params=compiler_1d,
        )(x1p, x2p, wqp, bqp, wkp, bkp, wvp, bvp, key_bias, wop, bop)
        return out[:B, :in_dim1]

    # ------------------------------------------------------------------
    # Path 2: split projections + flash attention.
    # TN = whole padded key axis (K/V VMEM-resident across all row tiles,
    # nkv == 1) whenever it fits; otherwise stream lane-dense 128-multiple
    # kv tiles with online softmax.
    # ------------------------------------------------------------------
    def _attn_bytes(tn_, nkv_):
        kv_buf = 2 if nkv_ > 1 else 1
        return (isz * (2 * TM * dqkp + kv_buf * tn_ * (dqkp + dvp)
                       + dvp * d1p + 2 * TM * d1p)
                + 4 * (TM * dvp + 2 * TM + 2 * TM * tn_))

    if N2p0 <= max_resident_kv and 2 * _attn_bytes(N2p0, 1) < budget:
        TN = N2p0
    else:
        TN = min(_round_up(tn, LANE), _round_up(N2p0, LANE))
    N2p = _round_up(N2, TN)
    nkv = N2p // TN
    x2p = _pad2(x2c, N2p, d2p)
    key_bias = jnp.where(jnp.arange(N2p)[None, :] < N2, 0.0,
                         _NEG_BIG).astype(jnp.float32)
    use_key_bias = (N2p != N2)

    # ---- Q projection (x1 @ wq_scaled + bq_scaled) over B row tiles ----
    q_arr = pl.pallas_call(
        _q_proj_kernel,
        out_shape=jax.ShapeDtypeStruct((Bp, dqkp), cdtype),
        grid=(nb,),
        in_specs=[
            pl.BlockSpec((TM, d1p), lambda i: (i, 0)),
            _const_spec((d1p, dqkp), lambda i: (0, 0)),
            _const_spec((1, dqkp), lambda i: (0, 0)),
        ],
        out_specs=pl.BlockSpec((TM, dqkp), lambda i: (i, 0)),
        compiler_params=compiler_1d,
    )(x1p, wqp, bqp)

    # ---- K/V projection (materialized once, not per q tile) ----
    k_arr, v_arr = pl.pallas_call(
        _kv_proj_kernel,
        out_shape=(jax.ShapeDtypeStruct((N2p, dqkp), cdtype),
                   jax.ShapeDtypeStruct((N2p, dvp), cdtype)),
        grid=(nkv,),
        in_specs=[
            pl.BlockSpec((TN, d2p), lambda j: (j, 0)),
            _const_spec((d2p, dqkp), lambda j: (0, 0)),
            _const_spec((1, dqkp), lambda j: (0, 0)),
            _const_spec((d2p, dvp), lambda j: (0, 0)),
            _const_spec((1, dvp), lambda j: (0, 0)),
        ],
        out_specs=(
            pl.BlockSpec((TN, dqkp), lambda j: (j, 0)),
            pl.BlockSpec((TN, dvp), lambda j: (j, 0)),
        ),
        compiler_params=compiler_1d,
    )(x2p, wkp, bkp, wvp, bvp)

    # ---- Flash attention + output projection ----
    if nkv == 1:
        # Constant block index -> single-buffered, DMA'd once, VMEM-resident.
        k_spec = _const_spec((TN, dqkp), lambda i, j: (0, 0))
        v_spec = _const_spec((TN, dvp), lambda i, j: (0, 0))
    else:
        k_spec = pl.BlockSpec((TN, dqkp), lambda i, j: (j, 0))
        v_spec = pl.BlockSpec((TN, dvp), lambda i, j: (j, 0))

    kern = functools.partial(_flash_attn_kernel, use_key_bias=use_key_bias)
    out = pl.pallas_call(
        kern,
        out_shape=jax.ShapeDtypeStruct((Bp, d1p), out_dtype),
        grid=(nb, nkv),
        in_specs=[
            pl.BlockSpec((TM, dqkp), lambda i, j: (i, 0)),   # q (pre-projected)
            k_spec,                                          # K
            v_spec,                                          # V
            pl.BlockSpec((1, TN), lambda i, j: (0, j)),      # key bias row
            _const_spec((dvp, d1p), lambda i, j: (0, 0)),    # wo
            _const_spec((1, d1p), lambda i, j: (0, 0)),      # bo
        ],
        out_specs=pl.BlockSpec((TM, d1p), lambda i, j: (i, 0)),
        scratch_shapes=[
            pltpu.VMEM((TM, 1), jnp.float32),    # running max m
            pltpu.VMEM((TM, 1), jnp.float32),    # running sum l
            pltpu.VMEM((TM, dvp), jnp.float32),  # running context acc
        ],
        compiler_params=pltpu.CompilerParams(
            dimension_semantics=("parallel", "arbitrary"),
            vmem_limit_bytes=budget),
    )(q_arr, k_arr, v_arr, key_bias, wop, bop)

    return out[:B, :in_dim1]


# ---------------------------------------------------------------------------
# Parameter init (synthetic) and pure-JAX reference
# ---------------------------------------------------------------------------
def init_params(key, in_dim1, in_dim2, k_dim, v_dim, num_heads, dtype=jnp.float32):
    """Linear weights stored transposed (in, out); biases as (1, out)."""
    kq, kk, kv, ko, bq, bk, bv, bo = jax.random.split(key, 8)
    qk_out = k_dim * num_heads
    v_out = v_dim * num_heads

    def lin(kw, kb_, din, dout):
        s = 1.0 / (din ** 0.5)
        w = jax.random.uniform(kw, (din, dout), dtype, minval=-s, maxval=s)
        b = jax.random.uniform(kb_, (1, dout), dtype, minval=-s, maxval=s)
        return w, b

    wq, bqv = lin(kq, bq, in_dim1, qk_out)
    wk, bkv = lin(kk, bk, in_dim2, qk_out)
    wv, bvv = lin(kv, bv, in_dim2, v_out)
    wo, bov = lin(ko, bo, v_out, in_dim1)
    return (wq, bqv, wk, bkv, wv, bvv, wo, bov)


def reference(x1, x2, params):
    wq, bq, wk, bk, wv, bv, wo, bo = params
    q = x1 @ wq + bq
    k = x2 @ wk + bk
    v = x2 @ wv + bv
    attn = jax.nn.softmax((q @ k.T) / (8.0 ** 0.5), axis=-1)
    return (attn @ v) @ wo + bo


# TODO(synk): the reference's optional `mask` argument (default None) is not
# exposed; only internal key padding is masked (via the additive key-bias row).

if __name__ == "__main__":
    key = jax.random.PRNGKey(0)

    def run_case(name, B, N2, in_dim1, in_dim2, k_dim, v_dim, heads, seed_key,
                 atol, rtol, **kw):
        kx1, kx2, kp = jax.random.split(seed_key, 3)
        x1 = jax.random.normal(kx1, (B, in_dim1), jnp.float32)
        x2 = jax.random.normal(kx2, (N2, in_dim2), jnp.float32)
        params = init_params(kp, in_dim1, in_dim2, k_dim, v_dim, heads)
        out = mutilhead_cross_attention(x1, x2, params, **kw)
        out = jax.block_until_ready(out)
        ref = reference(x1, x2, params)
        assert out.shape == (B, in_dim1)
        assert jnp.allclose(out.astype(jnp.float32), ref, atol=atol, rtol=rtol), \
            f"{name}: mismatch vs reference"

    k1, k2, k3, k4 = jax.random.split(key, 4)
    # 1) Small case matching the module's typical use -> fully fused path.
    run_case("fused", B=8, N2=16, in_dim1=32, in_dim2=24, k_dim=8, v_dim=8,
             heads=4, seed_key=k1, atol=2e-4, rtol=2e-4)
    # 2) Split path: 2 row tiles, K/V fully VMEM-resident (nkv == 1).
    run_case("resident", B=16, N2=48, in_dim1=32, in_dim2=24, k_dim=8, v_dim=8,
             heads=4, seed_key=k2, atol=2e-4, rtol=2e-4)
    # 3) Streaming path: online-softmax kv reduction + padded-key bias row.
    run_case("stream", B=32, N2=300, in_dim1=64, in_dim2=48, k_dim=16, v_dim=16,
             heads=4, seed_key=k3, atol=1e-3, rtol=1e-3,
             tn=128, max_resident_kv=0)
    # 4) bf16 MXU operands (f32 softmax / accumulation), loose tolerance.
    run_case("bf16", B=8, N2=16, in_dim1=32, in_dim2=24, k_dim=8, v_dim=8,
             heads=4, seed_key=k4, atol=1e-1, rtol=1e-1,
             compute_dtype=jnp.bfloat16)
    print("KERNEL_OK")
</pallas_src>

<mosaic_0001>
module attributes {stable_mosaic.version = 11 : i64} {
  func.func @_copy(%arg0: i32, %arg1: memref<8x128xf32, #tpu.memory_space<vmem>>, %arg2: memref<8x128xf32, #tpu.memory_space<vmem>>) attributes {dimension_semantics = [#tpu.dimension_semantics<arbitrary>], iteration_bounds = array<i64: 1>, scalar_prefetch = 0 : i64, scratch_operands = 0 : i64, tpu.core_type = #tpu.core_type<tc>, window_params = [{pipeline_mode = #tpu.pipeline_mode<synchronous>, transform_indices = @transform_0, window_bounds = array<i64: 8, 128>}, {pipeline_mode = #tpu.pipeline_mode<synchronous>, transform_indices = @transform_1, window_bounds = array<i64: 8, 128>}]} {
    %c0 = arith.constant 0 : index
    %c0_0 = arith.constant 0 : index
    %0 = vector.load %arg1[%c0, %c0_0] : memref<8x128xf32, #tpu.memory_space<vmem>>, vector<8x128xf32>
    %c0_1 = arith.constant 0 : index
    %c0_2 = arith.constant 0 : index
    %1 = vector.load %arg2[%c0_1, %c0_2] : memref<8x128xf32, #tpu.memory_space<vmem>>, vector<8x128xf32>
    tpu.vector_store %arg2[%c0_1, %c0_2], %0 {strides = array<i32>} : memref<8x128xf32, #tpu.memory_space<vmem>>, vector<8x128xf32>,
    return
  }
  func.func @transform_0(%arg0: i32) -> (i32, i32) {
    %c0_i32 = arith.constant 0 : i32
    %c0_i32_0 = arith.constant 0 : i32
    %c0_i32_1 = arith.constant 0 : i32
    return %c0_i32, %c0_i32_0 : i32, i32
  }
  func.func @transform_1(%arg0: i32) -> (i32, i32) {
    %c0_i32 = arith.constant 0 : i32
    %c0_i32_0 = arith.constant 0 : i32
    %c0_i32_1 = arith.constant 0 : i32
    return %c0_i32, %c0_i32_0 : i32, i32
  }
}

module attributes {stable_mosaic.version = 11 : i64} {
  func.func @_fused_kernel(%arg0: i32, %arg1: memref<8x128xf32, #tpu.memory_space<vmem>>, %arg2: memref<16x128xf32, #tpu.memory_space<vmem>>, %arg3: memref<128x128xf32, #tpu.memory_space<vmem>>, %arg4: memref<1x128xf32, #tpu.memory_space<vmem>>, %arg5: memref<128x128xf32, #tpu.memory_space<vmem>>, %arg6: memref<1x128xf32, #tpu.memory_space<vmem>>, %arg7: memref<128x128xf32, #tpu.memory_space<vmem>>, %arg8: memref<1x128xf32, #tpu.memory_space<vmem>>, %arg9: memref<1x16xf32, #tpu.memory_space<vmem>>, %arg10: memref<128x128xf32, #tpu.memory_space<vmem>>, %arg11: memref<1x128xf32, #tpu.memory_space<vmem>>, %arg12: memref<8x128xf32, #tpu.memory_space<vmem>>) attributes {dimension_semantics = [#tpu.dimension_semantics<parallel>], iteration_bounds = array<i64: 1>, scalar_prefetch = 0 : i64, scratch_operands = 0 : i64, tpu.core_type = #tpu.core_type<tc>, window_params = [{transform_indices = @transform_0, window_bounds = array<i64: 8, 128>}, {pipeline_mode = #tpu.pipeline_mode<synchronous>, transform_indices = @transform_1, window_bounds = array<i64: 16, 128>}, {pipeline_mode = #tpu.pipeline_mode<synchronous>, transform_indices = @transform_2, window_bounds = array<i64: 128, 128>}, {pipeline_mode = #tpu.pipeline_mode<synchronous>, transform_indices = @transform_3, window_bounds = array<i64: 1, 128>}, {pipeline_mode = #tpu.pipeline_mode<synchronous>, transform_indices = @transform_4, window_bounds = array<i64: 128, 128>}, {pipeline_mode = #tpu.pipeline_mode<synchronous>, transform_indices = @transform_5, window_bounds = array<i64: 1, 128>}, {pipeline_mode = #tpu.pipeline_mode<synchronous>, transform_indices = @transform_6, window_bounds = array<i64: 128, 128>}, {pipeline_mode = #tpu.pipeline_mode<synchronous>, transform_indices = @transform_7, window_bounds = array<i64: 1, 128>}, {pipeline_mode = #tpu.pipeline_mode<synchronous>, transform_indices = @transform_8, window_bounds = array<i64: 1, 16>}, {pipeline_mode = #tpu.pipeline_mode<synchronous>, transform_indices = @transform_9, window_bounds = array<i64: 128, 128>}, {pipeline_mode = #tpu.pipeline_mode<synchronous>, transform_indices = @transform_10, window_bounds = array<i64: 1, 128>}, {transform_indices = @transform_11, window_bounds = array<i64: 8, 128>}]} {
    %c0 = arith.constant 0 : index
    %c0_0 = arith.constant 0 : index
    %0 = vector.load %arg1[%c0, %c0_0] : memref<8x128xf32, #tpu.memory_space<vmem>>, vector<8x128xf32>
    %c0_1 = arith.constant 0 : index
    %c0_2 = arith.constant 0 : index
    %1 = vector.load %arg3[%c0_1, %c0_2] : memref<128x128xf32, #tpu.memory_space<vmem>>, vector<128x128xf32>
    %cst = arith.constant dense<0.000000e+00> : vector<8x128xf32>
    %2 = tpu.matmul %0, %1, %cst {dimension_numbers = #tpu.dot_dimension_numbers<[1], [0], [0], [1], [0, 0, 1, 1], [], []>} : vector<8x128xf32>, vector<128x128xf32>, vector<8x128xf32> -> vector<8x128xf32>
    %c0_3 = arith.constant 0 : index
    %c0_4 = arith.constant 0 : index
    %3 = vector.load %arg4[%c0_3, %c0_4] : memref<1x128xf32, #tpu.memory_space<vmem>>, vector<1x128xf32>
    %4 = vector.broadcast %3 : vector<1x128xf32> to vector<8x128xf32>
    %5 = arith.addf %2, %4 : vector<8x128xf32>
    %c0_5 = arith.constant 0 : index
    %c0_6 = arith.constant 0 : index
    %6 = vector.load %arg2[%c0_5, %c0_6] : memref<16x128xf32, #tpu.memory_space<vmem>>, vector<16x128xf32>
    %c0_7 = arith.constant 0 : index
    %c0_8 = arith.constant 0 : index
    %7 = vector.load %arg5[%c0_7, %c0_8] : memref<128x128xf32, #tpu.memory_space<vmem>>, vector<128x128xf32>
    %cst_9 = arith.constant dense<0.000000e+00> : vector<16x128xf32>
    %8 = tpu.matmul %6, %7, %cst_9 {dimension_numbers = #tpu.dot_dimension_numbers<[1], [0], [0], [1], [0, 0, 1, 1], [], []>} : vector<16x128xf32>, vector<128x128xf32>, vector<16x128xf32> -> vector<16x128xf32>
    %c0_10 = arith.constant 0 : index
    %c0_11 = arith.constant 0 : index
    %9 = vector.load %arg6[%c0_10, %c0_11] : memref<1x128xf32, #tpu.memory_space<vmem>>, vector<1x128xf32>
    %10 = vector.broadcast %9 : vector<1x128xf32> to vector<16x128xf32>
    %11 = arith.addf %8, %10 : vector<16x128xf32>
    %c0_12 = arith.constant 0 : index
    %c0_13 = arith.constant 0 : index
    %12 = vector.load %arg7[%c0_12, %c0_13] : memref<128x128xf32, #tpu.memory_space<vmem>>, vector<128x128xf32>
    %cst_14 = arith.constant dense<0.000000e+00> : vector<16x128xf32>
    %13 = tpu.matmul %6, %12, %cst_14 {dimension_numbers = #tpu.dot_dimension_numbers<[1], [0], [0], [1], [0, 0, 1, 1], [], []>} : vector<16x128xf32>, vector<128x128xf32>, vector<16x128xf32> -> vector<16x128xf32>
    %c0_15 = arith.constant 0 : index
    %c0_16 = arith.constant 0 : index
    %14 = vector.load %arg8[%c0_15, %c0_16] : memref<1x128xf32, #tpu.memory_space<vmem>>, vector<1x128xf32>
    %15 = vector.broadcast %14 : vector<1x128xf32> to vector<16x128xf32>
    %16 = arith.addf %13, %15 : vector<16x128xf32>
    %cst_17 = arith.constant dense<0.000000e+00> : vector<8x16xf32>
    %17 = tpu.matmul %5, %11, %cst_17 {dimension_numbers = #tpu.dot_dimension_numbers<[1], [1], [0], [0], [0, 0, 1, 0], [], []>} : vector<8x128xf32>, vector<16x128xf32>, vector<8x16xf32> -> vector<8x16xf32>
    %cst_18 = arith.constant dense<0xFF800000> : vector<8xf32>
    %18 = vector.multi_reduction <maximumf>, %17, %cst_18 [1] : vector<8x16xf32> to vector<8xf32>
    %19 = vector.shape_cast %18 : vector<8xf32> to vector<8x1xf32>
    %20 = vector.broadcast %19 : vector<8x1xf32> to vector<8x16xf32>
    %21 = arith.subf %17, %20 : vector<8x16xf32>
    %22 = math.exp %21 : vector<8x16xf32>
    %cst_19 = arith.constant dense<0.000000e+00> : vector<8xf32>
    %23 = vector.multi_reduction <add>, %22, %cst_19 [1] : vector<8x16xf32> to vector<8xf32>
    %24 = vector.shape_cast %23 : vector<8xf32> to vector<8x1xf32>
    %25 = tpu.reciprocal %24 {approx = true} : vector<8x1xf32> -> vector<8x1xf32>
    %26 = arith.mulf %24, %25 : vector<8x1xf32>
    %cst_20 = arith.constant 2.000000e+00 : f32
    %27 = vector.broadcast %cst_20 : f32 to vector<8x1xf32>
    %28 = arith.subf %27, %26 : vector<8x1xf32>
    %29 = arith.mulf %25, %28 : vector<8x1xf32>
    %cst_21 = arith.constant dense<0.000000e+00> : vector<8x128xf32>
    %30 = tpu.matmul %22, %16, %cst_21 {dimension_numbers = #tpu.dot_dimension_numbers<[1], [0], [0], [1], [0, 0, 1, 1], [], []>} : vector<8x16xf32>, vector<16x128xf32>, vector<8x128xf32> -> vector<8x128xf32>
    %31 = vector.broadcast %29 : vector<8x1xf32> to vector<8x128xf32>
    %32 = arith.mulf %30, %31 : vector<8x128xf32>
    %c0_22 = arith.constant 0 : index
    %c0_23 = arith.constant 0 : index
    %33 = vector.load %arg10[%c0_22, %c0_23] : memref<128x128xf32, #tpu.memory_space<vmem>>, vector<128x128xf32>
    %cst_24 = arith.constant dense<0.000000e+00> : vector<8x128xf32>
    %34 = tpu.matmul %32, %33, %cst_24 {dimension_numbers = #tpu.dot_dimension_numbers<[1], [0], [0], [1], [0, 0, 1, 1], [], []>} : vector<8x128xf32>, vector<128x128xf32>, vector<8x128xf32> -> vector<8x128xf32>
    %c0_25 = arith.constant 0 : index
    %c0_26 = arith.constant 0 : index
    %35 = vector.load %arg11[%c0_25, %c0_26] : memref<1x128xf32, #tpu.memory_space<vmem>>, vector<1x128xf32>
    %36 = vector.broadcast %35 : vector<1x128xf32> to vector<8x128xf32>
    %37 = arith.addf %34, %36 : vector<8x128xf32>
    %c0_27 = arith.constant 0 : index
    %c0_28 = arith.constant 0 : index
    %38 = vector.load %arg12[%c0_27, %c0_28] : memref<8x128xf32, #tpu.memory_space<vmem>>, vector<8x128xf32>
    tpu.vector_store %arg12[%c0_27, %c0_28], %37 {strides = array<i32>} : memref<8x128xf32, #tpu.memory_space<vmem>>, vector<8x128xf32>,
    return
  }
  func.func @transform_0(%arg0: i32) -> (i32, i32) {
    %c0_i32 = arith.constant 0 : i32
    %c0_i32_0 = arith.constant 0 : i32
    return %arg0, %c0_i32 : i32, i32
  }
  func.func @transform_1(%arg0: i32) -> (i32, i32) {
    %c0_i32 = arith.constant 0 : i32
    %c0_i32_0 = arith.constant 0 : i32
    %c0_i32_1 = arith.constant 0 : i32
    return %c0_i32, %c0_i32_0 : i32, i32
  }
  func.func @transform_2(%arg0: i32) -> (i32, i32) {
    %c0_i32 = arith.constant 0 : i32
    %c0_i32_0 = arith.constant 0 : i32
    %c0_i32_1 = arith.constant 0 : i32
    return %c0_i32, %c0_i32_0 : i32, i32
  }
  func.func @transform_3(%arg0: i32) -> (i32, i32) {
    %c0_i32 = arith.constant 0 : i32
    %c0_i32_0 = arith.constant 0 : i32
    %c0_i32_1 = arith.constant 0 : i32
    return %c0_i32, %c0_i32_0 : i32, i32
  }
  func.func @transform_4(%arg0: i32) -> (i32, i32) {
    %c0_i32 = arith.constant 0 : i32
    %c0_i32_0 = arith.constant 0 : i32
    %c0_i32_1 = arith.constant 0 : i32
    return %c0_i32, %c0_i32_0 : i32, i32
  }
  func.func @transform_5(%arg0: i32) -> (i32, i32) {
    %c0_i32 = arith.constant 0 : i32
    %c0_i32_0 = arith.constant 0 : i32
    %c0_i32_1 = arith.constant 0 : i32
    return %c0_i32, %c0_i32_0 : i32, i32
  }
  func.func @transform_6(%arg0: i32) -> (i32, i32) {
    %c0_i32 = arith.constant 0 : i32
    %c0_i32_0 = arith.constant 0 : i32
    %c0_i32_1 = arith.constant 0 : i32
    return %c0_i32, %c0_i32_0 : i32, i32
  }
  func.func @transform_7(%arg0: i32) -> (i32, i32) {
    %c0_i32 = arith.constant 0 : i32
    %c0_i32_0 = arith.constant 0 : i32
    %c0_i32_1 = arith.constant 0 : i32
    return %c0_i32, %c0_i32_0 : i32, i32
  }
  func.func @transform_8(%arg0: i32) -> (i32, i32) {
    %c0_i32 = arith.constant 0 : i32
    %c0_i32_0 = arith.constant 0 : i32
    %c0_i32_1 = arith.constant 0 : i32
    return %c0_i32, %c0_i32_0 : i32, i32
  }
  func.func @transform_9(%arg0: i32) -> (i32, i32) {
    %c0_i32 = arith.constant 0 : i32
    %c0_i32_0 = arith.constant 0 : i32
    %c0_i32_1 = arith.constant 0 : i32
    return %c0_i32, %c0_i32_0 : i32, i32
  }
  func.func @transform_10(%arg0: i32) -> (i32, i32) {
    %c0_i32 = arith.constant 0 : i32
    %c0_i32_0 = arith.constant 0 : i32
    %c0_i32_1 = arith.constant 0 : i32
    return %c0_i32, %c0_i32_0 : i32, i32
  }
  func.func @transform_11(%arg0: i32) -> (i32, i32) {
    %c0_i32 = arith.constant 0 : i32
    %c0_i32_0 = arith.constant 0 : i32
    return %arg0, %c0_i32 : i32, i32
  }
}

</mosaic_0001>

<llo_original>
// kernel: tpu_custom_call.1
$region0: #{tpu_custom_call.1}
  #allocation0 [shape = 'u32[]', space=smem, size = 0x4, offset = 0x4, fixed_abs, tag = 'smem constant byte address 0x4 - core index']
  #allocation1 [shape = 'u32[72,128]{1,0:T(1,128)}', space=vmem, size = 0x9000, scoped, tag = 'internal scratch']
  %s0 = inlined_call_operand.hbm [shape: f32[8,128], index: 0, kind: input, shape index: {}]
  %s1 = inlined_call_operand.hbm [shape: f32[8,128], index: 1, kind: output, shape index: {}]
  %s2 = sld [smem:[#allocation0]]
  $region18: #{tpu_custom_call.1} parent=0
    _
  %s4 = ssub.s32 1, %s2
  %s5 = scalar_select 0, %s4, %s2
  $region1: #{tpu_custom_call.1} parent=0
    #allocation2 [shape = 'u8[4096]{0}', space=vmem, size = 0x1000, scoped, tag = 'input window, operand 0, single buffered']
    #allocation3 [shape = 's32[1]{0}', space=sflag, size = 0x4, scoped, tag = 'scoped memory for tpu_custom_call.1']
    #allocation4 [shape = 's32[1]{0}', space=sflag, size = 0x4, scoped, tag = 'scoped memory for tpu_custom_call.1']
    #allocation5 [shape = 'u8[4096]{0}', space=vmem, size = 0x1000, scoped, tag = 'output window, operand 0, single buffered']
    %6 = vsyncpa [#allocation3], 0
    %7 = vsyncpa [#allocation4], 0
    // Predicated region
    $region2: #{tpu_custom_call.1} parent=1 // pred_check
      _
    $region3: #{tpu_custom_call.1} parent=1 // pred_check_branch
      %9 = sbr.rel (0) target = $region5
    $region4: #{tpu_custom_call.1} parent=1 // pred_region
      %11 = vsyncadd [#allocation3], 0
      %s13 = sshll.u32 %s0, 4
      %s14 = int_to_ptr.hbm [resolvable:$true] %s13
      %s15 = sshll.u32 [#allocation2], 4
      %s16 = int_to_ptr.vmem [resolvable:$true] %s15
      %18 = dma.hbm_to_vmem [thread:$0]  %s14, 128, %s16, [#allocation3]
    $region5: #{tpu_custom_call.1} parent=1 // pred_fallthru
      _
    // Predicated region
    $region6: #{tpu_custom_call.1} parent=1 // pred_check
      _
    $region7: #{tpu_custom_call.1} parent=1 // pred_check_branch
      %20 = sbr.rel (0) target = $region9
    $region8: #{tpu_custom_call.1} parent=1 // pred_region
      %22 = dma.done [#allocation3], 128
    $region9: #{tpu_custom_call.1} parent=1 // pred_fallthru
      _
    %v23 = vld [vmem:[#allocation2] sm:$0xff]
    %24 = vst [vmem:[#allocation5] sm:$0xff] %v23
    // Predicated region
    $region10: #{tpu_custom_call.1} parent=1 // pred_check
      _
    $region11: #{tpu_custom_call.1} parent=1 // pred_check_branch
      %26 = sbr.rel (0) target = $region13
    $region12: #{tpu_custom_call.1} parent=1 // pred_region
      %28 = vsyncadd [#allocation4], 0
      %s30 = sshll.u32 [#allocation5], 4
      %s31 = int_to_ptr.vmem [resolvable:$true] %s30
      %s32 = sshll.u32 %s1, 4
      %s33 = int_to_ptr.hbm [resolvable:$true] %s32
      %35 = dma.vmem_to_hbm [thread:$0]  %s31, 128, %s33, [#allocation4]
    $region13: #{tpu_custom_call.1} parent=1 // pred_fallthru
      _
    // Predicated region
    $region14: #{tpu_custom_call.1} parent=1 // pred_check
      _
    $region15: #{tpu_custom_call.1} parent=1 // pred_check_branch
      %37 = sbr.rel (0) target = $region17
    $region16: #{tpu_custom_call.1} parent=1 // pred_region
      %39 = dma.done [#allocation4], 128
    $region17: #{tpu_custom_call.1} parent=1 // pred_fallthru
      _
    %40 = vsyncpa [#allocation3], 1
    %41 = vsyncpa [#allocation4], 1

// kernel: tpu_custom_call.1
$region0: #{tpu_custom_call.1}
  #allocation0 [shape = 'u32[]', space=smem, size = 0x4, offset = 0x4, fixed_abs, tag = 'smem constant byte address 0x4 - core index']
  #allocation1 [shape = 'u32[72,128]{1,0:T(1,128)}', space=vmem, size = 0x9000, scoped, tag = 'internal scratch']
  %s0 = inlined_call_operand.hbm [shape: f32[8,128], index: 0, kind: input, shape index: {}]
  %s1 = inlined_call_operand.hbm [shape: f32[16,128], index: 1, kind: input, shape index: {}]
  %s2 = inlined_call_operand.hbm [shape: f32[128,128], index: 2, kind: input, shape index: {}]
  %s3 = inlined_call_operand.vmem [shape: f32[1,128], index: 3, kind: input, shape index: {}]
  %s4 = inlined_call_operand.hbm [shape: f32[128,128], index: 4, kind: input, shape index: {}]
  %s5 = inlined_call_operand.vmem [shape: f32[1,128], index: 5, kind: input, shape index: {}]
  %s6 = inlined_call_operand.hbm [shape: f32[128,128], index: 6, kind: input, shape index: {}]
  %s7 = inlined_call_operand.vmem [shape: f32[1,128], index: 7, kind: input, shape index: {}]
  %s8 = inlined_call_operand.vmem [shape: f32[1,16], index: 8, kind: input, shape index: {}]
  %s9 = inlined_call_operand.hbm [shape: f32[128,128], index: 9, kind: input, shape index: {}]
  %s10 = inlined_call_operand.vmem [shape: f32[1,128], index: 10, kind: input, shape index: {}]
  %s11 = inlined_call_operand.hbm [shape: f32[8,128], index: 11, kind: output, shape index: {}]
  %s12 = sld [smem:[#allocation0]]
  $region78: #{tpu_custom_call.1} parent=0
    _
  %s14 = ssub.s32 1, %s12
  %s15 = scalar_select 0, %s14, %s12
  $region1: #{tpu_custom_call.1} parent=0
    #allocation2 [shape = 'u8[4096]{0}', space=vmem, size = 0x1000, scoped, tag = 'input window, operand 0, single buffered']
    #allocation3 [shape = 's32[1]{0}', space=sflag, size = 0x4, scoped, tag = 'scoped memory for tpu_custom_call.1']
    #allocation4 [shape = 's32[1]{0}', space=sflag, size = 0x4, scoped, tag = 'scoped memory for tpu_custom_call.1']
    #allocation5 [shape = 'u8[8192]{0}', space=vmem, size = 0x2000, scoped, tag = 'input window, operand 1, single buffered']
    #allocation6 [shape = 's32[1]{0}', space=sflag, size = 0x4, scoped, tag = 'scoped memory for tpu_custom_call.1']
    #allocation7 [shape = 'u8[65536]{0}', space=vmem, size = 0x10000, scoped, tag = 'input window, operand 2, single buffered']
    #allocation8 [shape = 'u8[65536]{0}', space=vmem, size = 0x10000, scoped, tag = 'input window, operand 4, single buffered']
    #allocation9 [shape = 's32[1]{0}', space=sflag, size = 0x4, scoped, tag = 'scoped memory for tpu_custom_call.1']
    #allocation10 [shape = 'u8[65536]{0}', space=vmem, size = 0x10000, scoped, tag = 'input window, operand 6, single buffered']
    #allocation11 [shape = 'u8[65536]{0}', space=vmem, size = 0x10000, scoped, tag = 'input window, operand 9, single buffered']
    #allocation12 [shape = 's32[1]{0}', space=sflag, size = 0x4, scoped, tag = 'scoped memory for tpu_custom_call.1']
    #allocation13 [shape = 'u8[4096]{0}', space=vmem, size = 0x1000, scoped, tag = 'output window, operand 0, single buffered']
    %16 = vsyncpa [#allocation3], 0
    %17 = vsyncpa [#allocation6], 0
    %18 = vsyncpa [#allocation9], 0
    %19 = vsyncpa [#allocation12], 0
    %20 = vsyncpa [#allocation4], 0
    // Predicated region
    $region2: #{tpu_custom_call.1} parent=1 // pred_check
      _
    $region3: #{tpu_custom_call.1} parent=1 // pred_check_branch
      %22 = sbr.rel (0) target = $region5
    $region4: #{tpu_custom_call.1} parent=1 // pred_region
      %24 = vsyncadd [#allocation3], 0
      %s26 = sshll.u32 %s0, 4
      %s27 = int_to_ptr.hbm [resolvable:$true] %s26
      %s28 = sshll.u32 [#allocation2], 4
      %s29 = int_to_ptr.vmem [resolvable:$true] %s28
      %31 = dma.hbm_to_vmem [thread:$0]  %s27, 128, %s29, [#allocation3]
    $region5: #{tpu_custom_call.1} parent=1 // pred_fallthru
      _
    // Predicated region
    $region6: #{tpu_custom_call.1} parent=1 // pred_check
      _
    $region7: #{tpu_custom_call.1} parent=1 // pred_check_branch
      %33 = sbr.rel (0) target = $region9
    $region8: #{tpu_custom_call.1} parent=1 // pred_region
      %35 = vsyncadd [#allocation6], 0
      %s36 = sshll.u32 %s1, 4
      %s37 = int_to_ptr.hbm [resolvable:$true] %s36
      %s38 = sshll.u32 [#allocation5], 4
      %s39 = int_to_ptr.vmem [resolvable:$true] %s38
      %44 = dma.hbm_to_vmem [thread:$0]  %s37, 256, %s39, [#allocation6], 128, 128, 8
    $region9: #{tpu_custom_call.1} parent=1 // pred_fallthru
      _
    // Predicated region
    $region10: #{tpu_custom_call.1} parent=1 // pred_check
      _
    $region11: #{tpu_custom_call.1} parent=1 // pred_check_branch
      %46 = sbr.rel (0) target = $region13
    $region12: #{tpu_custom_call.1} parent=1 // pred_region
      %48 = vsyncadd [#allocation6], 0
      %s49 = sshll.u32 %s2, 4
      %s50 = int_to_ptr.hbm [resolvable:$true] %s49
      %s51 = sshll.u32 [#allocation7], 4
      %s52 = int_to_ptr.vmem [resolvable:$true] %s51
      %57 = dma.hbm_to_vmem [thread:$0]  %s50, 2048, %s52, [#allocation6], 128, 128, 8
    $region13: #{tpu_custom_call.1} parent=1 // pred_fallthru
      _
    // Predicated region
    $region14: #{tpu_custom_call.1} parent=1 // pred_check
      _
    $region15: #{tpu_custom_call.1} parent=1 // pred_check_branch
      %59 = sbr.rel (0) target = $region17
    $region16: #{tpu_custom_call.1} parent=1 // pred_region
      _
    $region17: #{tpu_custom_call.1} parent=1 // pred_fallthru
      _
    // Predicated region
    $region18: #{tpu_custom_call.1} parent=1 // pred_check
      _
    $region19: #{tpu_custom_call.1} parent=1 // pred_check_branch
      %61 = sbr.rel (0) target = $region21
    $region20: #{tpu_custom_call.1} parent=1 // pred_region
      %63 = vsyncadd [#allocation9], 0
      %s64 = sshll.u32 %s4, 4
      %s65 = int_to_ptr.hbm [resolvable:$true] %s64
      %s66 = sshll.u32 [#allocation8], 4
      %s67 = int_to_ptr.vmem [resolvable:$true] %s66
      %72 = dma.hbm_to_vmem [thread:$0]  %s65, 2048, %s67, [#allocation9], 128, 128, 8
    $region21: #{tpu_custom_call.1} parent=1 // pred_fallthru
      _
    // Predicated region
    $region22: #{tpu_custom_call.1} parent=1 // pred_check
      _
    $region23: #{tpu_custom_call.1} parent=1 // pred_check_branch
      %74 = sbr.rel (0) target = $region25
    $region24: #{tpu_custom_call.1} parent=1 // pred_region
      _
    $region25: #{tpu_custom_call.1} parent=1 // pred_fallthru
      _
    // Predicated region
    $region26: #{tpu_custom_call.1} parent=1 // pred_check
      _
    $region27: #{tpu_custom_call.1} parent=1 // pred_check_branch
      %76 = sbr.rel (0) target = $region29
    $region28: #{tpu_custom_call.1} parent=1 // pred_region
      %78 = vsyncadd [#allocation9], 0
      %s79 = sshll.u32 %s6, 4
      %s80 = int_to_ptr.hbm [resolvable:$true] %s79
      %s81 = sshll.u32 [#allocation10], 4
      %s82 = int_to_ptr.vmem [resolvable:$true] %s81
      %87 = dma.hbm_to_vmem [thread:$0]  %s80, 2048, %s82, [#allocation9], 128, 128, 8
    $region29: #{tpu_custom_call.1} parent=1 // pred_fallthru
      _
    // Predicated region
    $region30: #{tpu_custom_call.1} parent=1 // pred_check
      _
    $region31: #{tpu_custom_call.1} parent=1 // pred_check_branch
      %89 = sbr.rel (0) target = $region33
    $region32: #{tpu_custom_call.1} parent=1 // pred_region
      _
    $region33: #{tpu_custom_call.1} parent=1 // pred_fallthru
      _
    // Predicated region
    $region34: #{tpu_custom_call.1} parent=1 // pred_check
      _
    $region35: #{tpu_custom_call.1} parent=1 // pred_check_branch
      %91 = sbr.rel (0) target = $region37
    $region36: #{tpu_custom_call.1} parent=1 // pred_region
      _
    $region37: #{tpu_custom_call.1} parent=1 // pred_fallthru
      _
    // Predicated region
    $region38: #{tpu_custom_call.1} parent=1 // pred_check
      _
    $region39: #{tpu_custom_call.1} parent=1 // pred_check_branch
      %93 = sbr.rel (0) target = $region41
    $region40: #{tpu_custom_call.1} parent=1 // pred_region
      %95 = vsyncadd [#allocation12], 0
      %s96 = sshll.u32 %s9, 4
      %s97 = int_to_ptr.hbm [resolvable:$true] %s96
      %s98 = sshll.u32 [#allocation11], 4
      %s99 = int_to_ptr.vmem [resolvable:$true] %s98
      %104 = dma.hbm_to_vmem [thread:$0]  %s97, 2048, %s99, [#allocation12], 128, 128, 8
    $region41: #{tpu_custom_call.1} parent=1 // pred_fallthru
      _
    // Predicated region
    $region42: #{tpu_custom_call.1} parent=1 // pred_check
      _
    $region43: #{tpu_custom_call.1} parent=1 // pred_check_branch
      %106 = sbr.rel (0) target = $region45
    $region44: #{tpu_custom_call.1} parent=1 // pred_region
      _
    $region45: #{tpu_custom_call.1} parent=1 // pred_fallthru
      _
    // Predicated region
    $region46: #{tpu_custom_call.1} parent=1 // pred_check
      _
    $region47: #{tpu_custom_call.1} parent=1 // pred_check_branch
      %108 = sbr.rel (0) target = $region49
    $region48: #{tpu_custom_call.1} parent=1 // pred_region
      %110 = dma.done [#allocation3], 128
    $region49: #{tpu_custom_call.1} parent=1 // pred_fallthru
      _
    // Predicated region
    $region50: #{tpu_custom_call.1} parent=1 // pred_check
      _
    $region51: #{tpu_custom_call.1} parent=1 // pred_check_branch
      %112 = sbr.rel (0) target = $region53
    $region52: #{tpu_custom_call.1} parent=1 // pred_region
      %114 = dma.done [#allocation6], 256
    $region53: #{tpu_custom_call.1} parent=1 // pred_fallthru
      _
    // Predicated region
    $region54: #{tpu_custom_call.1} parent=1 // pred_check
      _
    $region55: #{tpu_custom_call.1} parent=1 // pred_check_branch
      %116 = sbr.rel (0) target = $region57
    $region56: #{tpu_custom_call.1} parent=1 // pred_region
      %118 = dma.done [#allocation6], 2048
    $region57: #{tpu_custom_call.1} parent=1 // pred_fallthru
      _
    // Predicated region
    $region58: #{tpu_custom_call.1} parent=1 // pred_check
      _
    $region59: #{tpu_custom_call.1} parent=1 // pred_check_branch
      %120 = sbr.rel (0) target = $region61
    $region60: #{tpu_custom_call.1} parent=1 // pred_region
      %122 = dma.done [#allocation9], 2048
    $region61: #{tpu_custom_call.1} parent=1 // pred_fallthru
      _
    // Predicated region
    $region62: #{tpu_custom_call.1} parent=1 // pred_check
      _
    $region63: #{tpu_custom_call.1} parent=1 // pred_check_branch
      %124 = sbr.rel (0) target = $region65
    $region64: #{tpu_custom_call.1} parent=1 // pred_region
      %126 = dma.done [#allocation9], 2048
    $region65: #{tpu_custom_call.1} parent=1 // pred_fallthru
      _
    // Predicated region
    $region66: #{tpu_custom_call.1} parent=1 // pred_check
      _
    $region67: #{tpu_custom_call.1} parent=1 // pred_check_branch
      %128 = sbr.rel (0) target = $region69
    $region68: #{tpu_custom_call.1} parent=1 // pred_region
      %130 = dma.done [#allocation12], 2048
    $region69: #{tpu_custom_call.1} parent=1 // pred_fallthru
      _
    %v131 = vld [vmem:[#allocation2] sm:$0xff]
    %v132 = vld [vmem:[#allocation7] sm:$0xff]
    %v133 = vld [vmem:[#allocation7 + $0x8] sm:$0xff]
    %v134 = vld [vmem:[#allocation7 + $0x10] sm:$0xff]
    %v135 = vld [vmem:[#allocation7 + $0x18] sm:$0xff]
    %v136 = vld [vmem:[#allocation7 + $0x20] sm:$0xff]
    %v137 = vld [vmem:[#allocation7 + $0x28] sm:$0xff]
    %v138 = vld [vmem:[#allocation7 + $0x30] sm:$0xff]
    %v139 = vld [vmem:[#allocation7 + $0x38] sm:$0xff]
    %v140 = vld [vmem:[#allocation7 + $0x40] sm:$0xff]
    %v141 = vld [vmem:[#allocation7 + $0x48] sm:$0xff]
    %v142 = vld [vmem:[#allocation7 + $0x50] sm:$0xff]
    %v143 = vld [vmem:[#allocation7 + $0x58] sm:$0xff]
    %v144 = vld [vmem:[#allocation7 + $0x60] sm:$0xff]
    %v145 = vld [vmem:[#allocation7 + $0x68] sm:$0xff]
    %v146 = vld [vmem:[#allocation7 + $0x70] sm:$0xff]
    %v147 = vld [vmem:[#allocation7 + $0x78] sm:$0xff]
    %v148 = vld [vmem:[%s3] sm:$0x1]
    %v150 = vperm.slane %v148, 0
    %152 = vmatpush.msra.mxu0 %v147
    %153 = vmatpush.msra.mxu0 %v146
    %154 = vmatpush.msra.mxu0 %v145
    %155 = vmatpush.msra.mxu0 %v144
    %156 = vmatpush.msra.mxu0 %v143
    %157 = vmatpush.msra.mxu0 %v142
    %158 = vmatpush.msra.mxu0 %v141
    %159 = vmatpush.msra.mxu0 %v140
    %160 = vmatpush.msra.mxu0 %v139
    %161 = vmatpush.msra.mxu0 %v138
    %162 = vmatpush.msra.mxu0 %v137
    %163 = vmatpush.msra.mxu0 %v136
    %164 = vmatpush.msra.mxu0 %v135
    %165 = vmatpush.msra.mxu0 %v134
    %166 = vmatpush.msra.mxu0 %v133
    %167 = vmatpush.msra.mxu0 %v132
    %168 = vmatmul.f32.gmra.mxu0 %v131
    %v169 = vpop.f32.mrf.mxu0
    %v170 = vadd.f32 %v150, %v169
    %171 = vdwg.mxu0
    %v172 = vld [vmem:[#allocation5] sm:$0xff]
    %v173 = vld [vmem:[#allocation5 + $0x8] sm:$0xff]
    %v174 = vld [vmem:[#allocation8] sm:$0xff]
    %v175 = vld [vmem:[#allocation8 + $0x8] sm:$0xff]
    %v176 = vld [vmem:[#allocation8 + $0x10] sm:$0xff]
    %v177 = vld [vmem:[#allocation8 + $0x18] sm:$0xff]
    %v178 = vld [vmem:[#allocation8 + $0x20] sm:$0xff]
    %v179 = vld [vmem:[#allocation8 + $0x28] sm:$0xff]
    %v180 = vld [vmem:[#allocation8 + $0x30] sm:$0xff]
    %v181 = vld [vmem:[#allocation8 + $0x38] sm:$0xff]
    %v182 = vld [vmem:[#allocation8 + $0x40] sm:$0xff]
    %v183 = vld [vmem:[#allocation8 + $0x48] sm:$0xff]
    %v184 = vld [vmem:[#allocation8 + $0x50] sm:$0xff]
    %v185 = vld [vmem:[#allocation8 + $0x58] sm:$0xff]
    %v186 = vld [vmem:[#allocation8 + $0x60] sm:$0xff]
    %v187 = vld [vmem:[#allocation8 + $0x68] sm:$0xff]
    %v188 = vld [vmem:[#allocation8 + $0x70] sm:$0xff]
    %v189 = vld [vmem:[#allocation8 + $0x78] sm:$0xff]
    %v190 = vld [vmem:[%s5] sm:$0x1]
    %v192 = vperm.slane %v190, 0
    %194 = vmatpush.msra.mxu0 %v189
    %195 = vmatpush.msra.mxu0 %v188
    %196 = vmatpush.msra.mxu0 %v187
    %197 = vmatpush.msra.mxu0 %v186
    %198 = vmatpush.msra.mxu0 %v185
    %199 = vmatpush.msra.mxu0 %v184
    %200 = vmatpush.msra.mxu0 %v183
    %201 = vmatpush.msra.mxu0 %v182
    %202 = vmatpush.msra.mxu0 %v181
    %203 = vmatpush.msra.mxu0 %v180
    %204 = vmatpush.msra.mxu0 %v179
    %205 = vmatpush.msra.mxu0 %v178
    %206 = vmatpush.msra.mxu0 %v177
    %207 = vmatpush.msra.mxu0 %v176
    %208 = vmatpush.msra.mxu0 %v175
    %209 = vmatpush.msra.mxu0 %v174
    %210 = vmatmul.f32.gmra.mxu0 %v172
    %v211 = vpop.f32.mrf.mxu0
    %v212 = vadd.f32 %v192, %v211
    %213 = vmatmul.f32.gmra.mxu0 %v173
    %v214 = vpop.f32.mrf.mxu0
    %v215 = vadd.f32 %v192, %v214
    %216 = vdwg.mxu0
    %v217 = vld [vmem:[#allocation10] sm:$0xff]
    %v218 = vld [vmem:[#allocation10 + $0x8] sm:$0xff]
    %v219 = vld [vmem:[#allocation10 + $0x10] sm:$0xff]
    %v220 = vld [vmem:[#allocation10 + $0x18] sm:$0xff]
    %v221 = vld [vmem:[#allocation10 + $0x20] sm:$0xff]
    %v222 = vld [vmem:[#allocation10 + $0x28] sm:$0xff]
    %v223 = vld [vmem:[#allocation10 + $0x30] sm:$0xff]
    %v224 = vld [vmem:[#allocation10 + $0x38] sm:$0xff]
    %v225 = vld [vmem:[#allocation10 + $0x40] sm:$0xff]
    %v226 = vld [vmem:[#allocation10 + $0x48] sm:$0xff]
    %v227 = vld [vmem:[#allocation10 + $0x50] sm:$0xff]
    %v228 = vld [vmem:[#allocation10 + $0x58] sm:$0xff]
    %v229 = vld [vmem:[#allocation10 + $0x60] sm:$0xff]
    %v230 = vld [vmem:[#allocation10 + $0x68] sm:$0xff]
    %v231 = vld [vmem:[#allocation10 + $0x70] sm:$0xff]
    %v232 = vld [vmem:[#allocation10 + $0x78] sm:$0xff]
    %v233 = vld [vmem:[%s7] sm:$0x1]
    %v235 = vperm.slane %v233, 0
    %237 = vmatpush.msra.mxu0 %v232
    %238 = vmatpush.msra.mxu0 %v231
    %239 = vmatpush.msra.mxu0 %v230
    %240 = vmatpush.msra.mxu0 %v229
    %241 = vmatpush.msra.mxu0 %v228
    %242 = vmatpush.msra.mxu0 %v227
    %243 = vmatpush.msra.mxu0 %v226
    %244 = vmatpush.msra.mxu0 %v225
    %245 = vmatpush.msra.mxu0 %v224
    %246 = vmatpush.msra.mxu0 %v223
    %247 = vmatpush.msra.mxu0 %v222
    %248 = vmatpush.msra.mxu0 %v221
    %249 = vmatpush.msra.mxu0 %v220
    %250 = vmatpush.msra.mxu0 %v219
    %251 = vmatpush.msra.mxu0 %v218
    %252 = vmatpush.msra.mxu0 %v217
    %253 = vmatmul.f32.gmra.mxu0 %v172
    %v254 = vpop.f32.mrf.mxu0
    %v255 = vadd.f32 %v235, %v254
    %256 = vmatmul.f32.gmra.mxu0 %v173
    %v257 = vpop.f32.mrf.mxu0
    %v258 = vadd.f32 %v235, %v257
    %259 = vdwg.mxu0
    %260 = vmatpush.xpose.msra.mxu0 0.0
    %261 = vmatpush.xpose.msra.mxu0 0.0
    %262 = vmatpush.xpose.msra.mxu0 0.0
    %263 = vmatpush.xpose.msra.mxu0 0.0
    %264 = vmatpush.xpose.msra.mxu0 0.0
    %265 = vmatpush.xpose.msra.mxu0 0.0
    %266 = vmatpush.xpose.msra.mxu0 0.0
    %267 = vmatpush.xpose.msra.mxu0 0.0
    %268 = vmatpush.xpose.msra.mxu0 0.0
    %269 = vmatpush.xpose.msra.mxu0 0.0
    %270 = vmatpush.xpose.msra.mxu0 0.0
    %271 = vmatpush.xpose.msra.mxu0 0.0
    %272 = vmatpush.xpose.msra.mxu0 0.0
    %273 = vmatpush.xpose.msra.mxu0 0.0
    %274 = vmatpush.xpose.msra.mxu0 %v215
    %275 = vmatpush.xpose.msra.mxu0 %v212
    %276 = vmatmul.f32.gmra.mxu0 %v170
    %v277 = vpop.f32.mrf.mxu0
    %v278 = vadd.f32 0.0, %v277
    %279 = vdwg.mxu0
    %vm280 = vcmask 130048
    %v281 = vsel %vm280, %v278, -inf
    %282 = vmax.xlane.f32.xlu0 %v281
    %v283 = vpop.xlane.xlu0 %282
    %v284 = vsub.f32 %v278, %v283
    %v285 = vmul.f32 %v284, 1.442695
    %v286 = vpow.pop %v285
    %v287 = vsel %vm280, %v286, 0.0
    %288 = vadd.xlane.f32.xlu0 %v287
    %v289 = vpop.xlane.xlu0 %288
    %v290 = vrcp.pop %v289
    %v291 = vmul.f32 %v289, %v290
    %v292 = vsub.f32 2.0, %v291
    %v293 = vmul.f32 %v290, %v292
    %v295 = vsel %vm280, %v286, 0
    %297 = vmatpush.msra.mxu0 0.0
    %298 = vmatpush.msra.mxu0 0.0
    %299 = vmatpush.msra.mxu0 0.0
    %300 = vmatpush.msra.mxu0 0.0
    %301 = vmatpush.msra.mxu0 0.0
    %302 = vmatpush.msra.mxu0 0.0
    %303 = vmatpush.msra.mxu0 0.0
    %304 = vmatpush.msra.mxu0 0.0
    %305 = vmatpush.msra.mxu0 0.0
    %306 = vmatpush.msra.mxu0 0.0
    %307 = vmatpush.msra.mxu0 0.0
    %308 = vmatpush.msra.mxu0 0.0
    %309 = vmatpush.msra.mxu0 0.0
    %310 = vmatpush.msra.mxu0 0.0
    %311 = vmatpush.msra.mxu0 %v258
    %312 = vmatpush.msra.mxu0 %v255
    %313 = vmatmul.f32.gmra.mxu0 %v295
    %v314 = vpop.f32.mrf.mxu0
    %v315 = vadd.f32 0.0, %v314
    %316 = vdwg.mxu0
    %v317 = vmul.f32 %v315, %v293
    %v318 = vld [vmem:[#allocation11] sm:$0xff]
    %v319 = vld [vmem:[#allocation11 + $0x8] sm:$0xff]
    %v320 = vld [vmem:[#allocation11 + $0x10] sm:$0xff]
    %v321 = vld [vmem:[#allocation11 + $0x18] sm:$0xff]
    %v322 = vld [vmem:[#allocation11 + $0x20] sm:$0xff]
    %v323 = vld [vmem:[#allocation11 + $0x28] sm:$0xff]
    %v324 = vld [vmem:[#allocation11 + $0x30] sm:$0xff]
    %v325 = vld [vmem:[#allocation11 + $0x38] sm:$0xff]
    %v326 = vld [vmem:[#allocation11 + $0x40] sm:$0xff]
    %v327 = vld [vmem:[#allocation11 + $0x48] sm:$0xff]
    %v328 = vld [vmem:[#allocation11 + $0x50] sm:$0xff]
    %v329 = vld [vmem:[#allocation11 + $0x58] sm:$0xff]
    %v330 = vld [vmem:[#allocation11 + $0x60] sm:$0xff]
    %v331 = vld [vmem:[#allocation11 + $0x68] sm:$0xff]
    %v332 = vld [vmem:[#allocation11 + $0x70] sm:$0xff]
    %v333 = vld [vmem:[#allocation11 + $0x78] sm:$0xff]
    %v334 = vld [vmem:[%s10] sm:$0x1]
    %v336 = vperm.slane %v334, 0
    %338 = vmatpush.msra.mxu0 %v333
    %339 = vmatpush.msra.mxu0 %v332
    %340 = vmatpush.msra.mxu0 %v331
    %341 = vmatpush.msra.mxu0 %v330
    %342 = vmatpush.msra.mxu0 %v329
    %343 = vmatpush.msra.mxu0 %v328
    %344 = vmatpush.msra.mxu0 %v327
    %345 = vmatpush.msra.mxu0 %v326
    %346 = vmatpush.msra.mxu0 %v325
    %347 = vmatpush.msra.mxu0 %v324
    %348 = vmatpush.msra.mxu0 %v323
    %349 = vmatpush.msra.mxu0 %v322
    %350 = vmatpush.msra.mxu0 %v321
    %351 = vmatpush.msra.mxu0 %v320
    %352 = vmatpush.msra.mxu0 %v319
    %353 = vmatpush.msra.mxu0 %v318
    %354 = vmatmul.f32.gmra.mxu0 %v317
    %v355 = vpop.f32.mrf.mxu0
    %v356 = vadd.f32 %v336, %v355
    %357 = vdwg.mxu0
    %358 = vst [vmem:[#allocation13] sm:$0xff] %v356
    // Predicated region
    $region70: #{tpu_custom_call.1} parent=1 // pred_check
      _
    $region71: #{tpu_custom_call.1} parent=1 // pred_check_branch
      %360 = sbr.rel (0) target = $region73
    $region72: #{tpu_custom_call.1} parent=1 // pred_region
      %362 = vsyncadd [#allocation4], 0
      %s364 = sshll.u32 [#allocation13], 4
      %s365 = int_to_ptr.vmem [resolvable:$true] %s364
      %s366 = sshll.u32 %s11, 4
      %s367 = int_to_ptr.hbm [resolvable:$true] %s366
      %369 = dma.vmem_to_hbm [thread:$0]  %s365, 128, %s367, [#allocation4]
    $region73: #{tpu_custom_call.1} parent=1 // pred_fallthru
      _
    // Predicated region
    $region74: #{tpu_custom_call.1} parent=1 // pred_check
      _
    $region75: #{tpu_custom_call.1} parent=1 // pred_check_branch
      %371 = sbr.rel (0) target = $region77
    $region76: #{tpu_custom_call.1} parent=1 // pred_region
      %373 = dma.done [#allocation4], 128
    $region77: #{tpu_custom_call.1} parent=1 // pred_fallthru
      _
    %374 = vsyncpa [#allocation3], 1
    %375 = vsyncpa [#allocation6], 1
    %376 = vsyncpa [#allocation9], 1
    %377 = vsyncpa [#allocation12], 1
    %378 = vsyncpa [#allocation4], 1

</llo_original>
